<compile_context>
chip_gen: v6e
topology: v6e:2x2x1
jax: 0.10.0
libtpu: 0.0.40
codegen_flags: <defaults>
</compile_context>

<pallas_src>
import jax
import jax.numpy as jnp
from jax import lax
from jax.experimental import pallas as pl
from jax.experimental.pallas import tpu as pltpu

_MIB = 1024 * 1024


def _vmem_capacity_bytes():
    """Physical VMEM per TensorCore; conservative 64 MiB (v7x) fallback."""
    default = 64 * _MIB
    try:
        info = pltpu.get_tpu_info()
        return int(getattr(info, "vmem_capacity_bytes", default))
    except Exception:  # not queryable at trace time -> assume smallest VMEM
        return default


def _choose_tile_b(B, D, max_tile_bytes):
    """Largest row tile whose *padded* x block fits in max_tile_bytes.

    The (tile_b, D) f32 VMEM block lane-pads D up to a multiple of 128, so the
    budget uses d_pad, not D.  tile_b is a multiple of 128 so the lane-dense
    (3, tile_b) output block satisfies the (8, 128) block constraint; if the
    whole batch fits in one tile we use B directly (block dims == array dims
    are always legal).
    """
    d_pad = ((D + 127) // 128) * 128
    bytes_per_row = d_pad * 4  # f32
    tile = max_tile_bytes // bytes_per_row
    tile = max(128, (tile // 128) * 128)
    if B <= tile:
        return B
    return int(tile)


def _two_layer_out_kernel(x_ref, w_ref, b_ref, o_ref):
    # Fused: three Linear(InSize, 1) heads == one (3, D) x (tile_b, D)^T matmul.
    x = x_ref[...]  # (tile_b, D)
    w = w_ref[...]  # (3, D)  -- row k == head k's weights
    b = b_ref[...]  # (3, 1)
    y = lax.dot_general(
        w, x,
        dimension_numbers=(((1,), (1,)), ((), ())),  # contract D with D
        preferred_element_type=jnp.float32,
    )  # (3, tile_b)  -- lane-dense along tile_b
    o_ref[...] = (y + b).astype(o_ref.dtype)


def two_layer_out(x, w_packed, b_packed):
    """x: (B, InSize) f32, w_packed: (3, InSize) f32, b_packed: (3, 1) f32.

    Returns (B, 3), matching torch.cat((linear1(x), linear2(x), linear3(x)), 1).
    """
    B, D = x.shape
    assert w_packed.shape == (3, D)
    assert b_packed.shape == (3, 1)

    vmem_cap = _vmem_capacity_bytes()
    # ~96 MiB on 128-MiB-VMEM chips (v5e/v6e), 48 MiB on v7x (64 MiB physical).
    vmem_limit = min(96 * _MIB, (vmem_cap * 3) // 4)
    # Per x buffer (double-buffered => x2 resident): ~24 MiB on v5e/v6e, ~12 MiB on v7x.
    max_tile_bytes = min(24 * _MIB, vmem_cap // 5)

    tile_b = _choose_tile_b(B, D, max_tile_bytes)
    grid = (pl.cdiv(B, tile_b),)

    y_t = pl.pallas_call(
        _two_layer_out_kernel,
        out_shape=jax.ShapeDtypeStruct((3, B), jnp.float32),
        grid_spec=pl.GridSpec(
            grid=grid,
            in_specs=[
                # x: one batch tile per grid step (double-buffered by Pallas).
                pl.BlockSpec((tile_b, D), lambda i: (i, 0)),
                # W, b: constant block index -> fetched once, stay resident.
                pl.BlockSpec((3, D), lambda i: (0, 0)),
                pl.BlockSpec((3, 1), lambda i: (0, 0)),
            ],
            # Lane-dense (3, tile_b) output: unmasked contiguous stores.
            out_specs=pl.BlockSpec((3, tile_b), lambda i: (0, i)),
        ),
        compiler_params=pltpu.CompilerParams(
            # Each row tile is independent -> parallel (v7x megacore sharding).
            dimension_semantics=("parallel",),
            vmem_limit_bytes=vmem_limit,
        ),
    )(x, w_packed, b_packed)
    # TODO(synk): for very large InSize, add a trailing "arbitrary" K grid axis
    # with a (3, tile_b) f32 VMEM accumulator (zero at k==0, emit at k==last)
    # instead of shrinking tile_b.
    # TODO(synk): for very small InSize (D << 128), lane-pack 128//D batch rows
    # into the lane dim against a block-diagonal weight to recover full lane
    # utilization; and/or accept bf16 x to halve HBM read bytes.
    return y_t.T  # (B, 3)


def init_params(key, in_size):
    """Deterministic synthetic init matching nn.Linear(InSize, 1) x3 shapes.

    PyTorch default init is U(-1/sqrt(InSize), 1/sqrt(InSize)); reproduce that
    range deterministically with JAX PRNG.
    """
    bound = 1.0 / jnp.sqrt(jnp.float32(in_size))
    keys = jax.random.split(key, 6)
    ws = [
        jax.random.uniform(keys[i], (1, in_size), jnp.float32, -bound, bound)
        for i in range(3)
    ]
    bs = [
        jax.random.uniform(keys[3 + i], (1,), jnp.float32, -bound, bound)
        for i in range(3)
    ]
    # Row k of w_packed == head k's weight row (matches torch.cat dim=1 order).
    w_packed = jnp.concatenate(ws, axis=0)            # (3, InSize)
    b_packed = jnp.concatenate(bs, axis=0)[:, None]   # (3, 1)
    return w_packed, b_packed


if __name__ == "__main__":
    key = jax.random.PRNGKey(0)
    k_x, k_p = jax.random.split(key)

    B, IN_SIZE = 8, 32
    x = jax.random.normal(k_x, (B, IN_SIZE), jnp.float32)
    w_packed, b_packed = init_params(k_p, IN_SIZE)

    y = two_layer_out(x, w_packed, b_packed)
    y = jax.block_until_ready(y)

    # Reference check in plain JAX (same math as the PyTorch forward).
    y_ref = x @ w_packed.T + b_packed.reshape(1, 3)
    assert y.shape == (B, 3)
    assert jnp.allclose(y, y_ref, atol=1e-5, rtol=1e-5)

    print("KERNEL_OK")
</pallas_src>

<mosaic_0001>
module attributes {stable_mosaic.version = 11 : i64} {
  func.func @_two_layer_out_kernel(%arg0: i32, %arg1: memref<8x32xf32, #tpu.memory_space<vmem>>, %arg2: memref<3x32xf32, #tpu.memory_space<vmem>>, %arg3: memref<3x1xf32, #tpu.memory_space<vmem>>, %arg4: memref<3x8xf32, #tpu.memory_space<vmem>>) attributes {dimension_semantics = [#tpu.dimension_semantics<parallel>], iteration_bounds = array<i64: 1>, scalar_prefetch = 0 : i64, scratch_operands = 0 : i64, tpu.core_type = #tpu.core_type<tc>, window_params = [{transform_indices = @transform_0, window_bounds = array<i64: 8, 32>}, {pipeline_mode = #tpu.pipeline_mode<synchronous>, transform_indices = @transform_1, window_bounds = array<i64: 3, 32>}, {pipeline_mode = #tpu.pipeline_mode<synchronous>, transform_indices = @transform_2, window_bounds = array<i64: 3, 1>}, {transform_indices = @transform_3, window_bounds = array<i64: 3, 8>}]} {
    %c0 = arith.constant 0 : index
    %c0_0 = arith.constant 0 : index
    %0 = vector.load %arg1[%c0, %c0_0] : memref<8x32xf32, #tpu.memory_space<vmem>>, vector<8x32xf32>
    %c0_1 = arith.constant 0 : index
    %c0_2 = arith.constant 0 : index
    %1 = vector.load %arg2[%c0_1, %c0_2] : memref<3x32xf32, #tpu.memory_space<vmem>>, vector<3x32xf32>
    %c0_3 = arith.constant 0 : index
    %c0_4 = arith.constant 0 : index
    %2 = vector.load %arg3[%c0_3, %c0_4] : memref<3x1xf32, #tpu.memory_space<vmem>>, vector<3x1xf32>
    %cst = arith.constant dense<0.000000e+00> : vector<3x8xf32>
    %3 = tpu.matmul %1, %0, %cst {dimension_numbers = #tpu.dot_dimension_numbers<[1], [1], [0], [0], [0, 0, 1, 0], [], []>} : vector<3x32xf32>, vector<8x32xf32>, vector<3x8xf32> -> vector<3x8xf32>
    %4 = vector.broadcast %2 : vector<3x1xf32> to vector<3x8xf32>
    %5 = arith.addf %3, %4 : vector<3x8xf32>
    %c0_5 = arith.constant 0 : index
    %c0_6 = arith.constant 0 : index
    %6 = vector.load %arg4[%c0_5, %c0_6] : memref<3x8xf32, #tpu.memory_space<vmem>>, vector<3x8xf32>
    tpu.vector_store %arg4[%c0_5, %c0_6], %5 {strides = array<i32>} : memref<3x8xf32, #tpu.memory_space<vmem>>, vector<3x8xf32>,
    return
  }
  func.func @transform_0(%arg0: i32) -> (i32, i32) {
    %c0_i32 = arith.constant 0 : i32
    %c0_i32_0 = arith.constant 0 : i32
    return %arg0, %c0_i32 : i32, i32
  }
  func.func @transform_1(%arg0: i32) -> (i32, i32) {
    %c0_i32 = arith.constant 0 : i32
    %c0_i32_0 = arith.constant 0 : i32
    %c0_i32_1 = arith.constant 0 : i32
    return %c0_i32, %c0_i32_0 : i32, i32
  }
  func.func @transform_2(%arg0: i32) -> (i32, i32) {
    %c0_i32 = arith.constant 0 : i32
    %c0_i32_0 = arith.constant 0 : i32
    %c0_i32_1 = arith.constant 0 : i32
    return %c0_i32, %c0_i32_0 : i32, i32
  }
  func.func @transform_3(%arg0: i32) -> (i32, i32) {
    %c0_i32 = arith.constant 0 : i32
    %c0_i32_0 = arith.constant 0 : i32
    return %c0_i32, %arg0 : i32, i32
  }
}

</mosaic_0001>

<llo_original>
// kernel: tpu_custom_call.1
$region0: #{tpu_custom_call.1}
  #allocation0 [shape = 'u32[]', space=smem, size = 0x4, offset = 0x4, fixed_abs, tag = 'smem constant byte address 0x4 - core index']
  #allocation1 [shape = 'u32[144,128]{1,0:T(1,128)}', space=vmem, size = 0x12000, scoped, tag = 'internal scratch']
  %s0 = inlined_call_operand.hbm [shape: f32[8,32], index: 0, kind: input, shape index: {}]
  %s1 = inlined_call_operand.vmem [shape: f32[3,32], index: 1, kind: input, shape index: {}]
  %s2 = inlined_call_operand.vmem [shape: f32[3,1], index: 2, kind: input, shape index: {}]
  %s3 = inlined_call_operand.hbm [shape: f32[3,8], index: 3, kind: output, shape index: {}]
  %s4 = sld [smem:[#allocation0]]
  $region26: #{tpu_custom_call.1} parent=0
    _
  %s6 = ssub.s32 1, %s4
  %s7 = scalar_select 0, %s6, %s4
  $region1: #{tpu_custom_call.1} parent=0
    #allocation2 [shape = 'u8[4096]{0}', space=vmem, size = 0x1000, scoped, tag = 'input window, operand 0, single buffered']
    #allocation3 [shape = 's32[1]{0}', space=sflag, size = 0x4, scoped, tag = 'scoped memory for tpu_custom_call.1']
    #allocation4 [shape = 's32[1]{0}', space=sflag, size = 0x4, scoped, tag = 'scoped memory for tpu_custom_call.1']
    #allocation5 [shape = 'u8[2048]{0}', space=vmem, size = 0x800, scoped, tag = 'output window, operand 0, single buffered']
    %8 = vsyncpa [#allocation3], 0
    %9 = vsyncpa [#allocation4], 0
    // Predicated region
    $region2: #{tpu_custom_call.1} parent=1 // pred_check
      _
    $region3: #{tpu_custom_call.1} parent=1 // pred_check_branch
      %11 = sbr.rel (0) target = $region5
    $region4: #{tpu_custom_call.1} parent=1 // pred_region
      %s13 = ssub.s32 128, 128
      %14 = vsyncadd [#allocation3], %s13
      %s16 = sshll.u32 [#allocation2], 4
      %s17 = int_to_ptr.vmem [resolvable:$true] %s16
      %19 = dma.hbm_to_vmem [thread:$0]  %s0, 128, %s17, [#allocation3]
    $region5: #{tpu_custom_call.1} parent=1 // pred_fallthru
      _
    // Predicated region
    $region6: #{tpu_custom_call.1} parent=1 // pred_check
      _
    $region7: #{tpu_custom_call.1} parent=1 // pred_check_branch
      %21 = sbr.rel (0) target = $region9
    $region8: #{tpu_custom_call.1} parent=1 // pred_region
      _
    $region9: #{tpu_custom_call.1} parent=1 // pred_fallthru
      _
    // Predicated region
    $region10: #{tpu_custom_call.1} parent=1 // pred_check
      _
    $region11: #{tpu_custom_call.1} parent=1 // pred_check_branch
      %23 = sbr.rel (0) target = $region13
    $region12: #{tpu_custom_call.1} parent=1 // pred_region
      _
    $region13: #{tpu_custom_call.1} parent=1 // pred_fallthru
      _
    // Predicated region
    $region14: #{tpu_custom_call.1} parent=1 // pred_check
      _
    $region15: #{tpu_custom_call.1} parent=1 // pred_check_branch
      %25 = sbr.rel (0) target = $region17
    $region16: #{tpu_custom_call.1} parent=1 // pred_region
      %26 = dma.done [#allocation3], 128
    $region17: #{tpu_custom_call.1} parent=1 // pred_fallthru
      _
    %v27 = vld [vmem:[#allocation2] sm:$0xff]
    %v28 = vld [vmem:[%s1] sm:$0x7]
    %v29 = vld [vmem:[%s2] sm:$0x7]
    %31 = vset.pattern.permute.xlu0 0
    %32 = vperm.xlu0 %31, %v29
    %v33 = vpop.permute.xlu0 %32
    %vm35 = vcmask 261120
    %v37 = vsel %vm35, %v28, 0
    %v40 = vsel %vm35, %v27, 0
    %42 = vmatprep.subr.mxu0 0.0
    %43 = vmatpush1.xpose.msra.mxu0 0.0
    %44 = vmatprep.subr.mxu0 0.0
    %45 = vmatpush1.xpose.msra.mxu0 0.0
    %46 = vmatprep.subr.mxu0 0.0
    %47 = vmatpush1.xpose.msra.mxu0 0.0
    %48 = vmatprep.subr.mxu0 0.0
    %49 = vmatpush1.xpose.msra.mxu0 0.0
    %50 = vmatprep.subr.mxu0 0.0
    %51 = vmatpush1.xpose.msra.mxu0 0.0
    %52 = vmatprep.subr.mxu0 0.0
    %53 = vmatpush1.xpose.msra.mxu0 0.0
    %54 = vmatprep.subr.mxu0 0.0
    %55 = vmatpush1.xpose.msra.mxu0 0.0
    %56 = vmatprep.subr.mxu0 0.0
    %57 = vmatpush1.xpose.msra.mxu0 0.0
    %58 = vmatprep.subr.mxu0 0.0
    %59 = vmatpush1.xpose.msra.mxu0 0.0
    %60 = vmatprep.subr.mxu0 0.0
    %61 = vmatpush1.xpose.msra.mxu0 0.0
    %62 = vmatprep.subr.mxu0 0.0
    %63 = vmatpush1.xpose.msra.mxu0 0.0
    %64 = vmatprep.subr.mxu0 0.0
    %65 = vmatpush1.xpose.msra.mxu0 0.0
    %66 = vmatprep.subr.mxu0 0.0
    %67 = vmatpush1.xpose.msra.mxu0 0.0
    %68 = vmatprep.subr.mxu0 0.0
    %69 = vmatpush1.xpose.msra.mxu0 0.0
    %70 = vmatprep.subr.mxu0 0.0
    %71 = vmatpush1.xpose.msra.mxu0 0.0
    %72 = vmatprep.subr.mxu0 0.0
    %73 = vmatpush1.xpose.msra.mxu0 %v40
    %74 = vmatprep.subr.mxu0 0.0
    %75 = vmatpush2.xpose.msra.mxu0 0.0
    %76 = vmatprep.subr.mxu0 0.0
    %77 = vmatpush2.xpose.msra.mxu0 0.0
    %78 = vmatprep.subr.mxu0 0.0
    %79 = vmatpush2.xpose.msra.mxu0 0.0
    %80 = vmatprep.subr.mxu0 0.0
    %81 = vmatpush2.xpose.msra.mxu0 0.0
    %82 = vmatprep.subr.mxu0 0.0
    %83 = vmatpush2.xpose.msra.mxu0 0.0
    %84 = vmatprep.subr.mxu0 0.0
    %85 = vmatpush2.xpose.msra.mxu0 0.0
    %86 = vmatprep.subr.mxu0 0.0
    %87 = vmatpush2.xpose.msra.mxu0 0.0
    %88 = vmatprep.subr.mxu0 0.0
    %89 = vmatpush2.xpose.msra.mxu0 0.0
    %90 = vmatprep.subr.mxu0 0.0
    %91 = vmatpush2.xpose.msra.mxu0 0.0
    %92 = vmatprep.subr.mxu0 0.0
    %93 = vmatpush2.xpose.msra.mxu0 0.0
    %94 = vmatprep.subr.mxu0 0.0
    %95 = vmatpush2.xpose.msra.mxu0 0.0
    %96 = vmatprep.subr.mxu0 0.0
    %97 = vmatpush2.xpose.msra.mxu0 0.0
    %98 = vmatprep.subr.mxu0 0.0
    %99 = vmatpush2.xpose.msra.mxu0 0.0
    %100 = vmatprep.subr.mxu0 0.0
    %101 = vmatpush2.xpose.msra.mxu0 0.0
    %102 = vmatprep.subr.mxu0 0.0
    %103 = vmatpush2.xpose.msra.mxu0 0.0
    %104 = vmatprep.subr.mxu0 0.0
    %105 = vmatpush2.xpose.msra.mxu0 0.0
    %106 = vmatprep.mubr.f32.mxu0 0.0
    %107 = vmatmul.mubr.f32.gmra.mxu0 %v37
    %v108 = vpop.f32.mrf.mxu0
    %v109 = vadd.f32 %v33, %v108
    %v110 = vpop.f32.mrf.mxu0
    %111 = vdwg.mxu0
    %vm112 = vcmask 59392
    %113 = vst.msk [vmem:[#allocation5] sm:$0x7] %vm112, %v109
    // Predicated region
    $region18: #{tpu_custom_call.1} parent=1 // pred_check
      _
    $region19: #{tpu_custom_call.1} parent=1 // pred_check_branch
      %115 = sbr.rel (0) target = $region21
    $region20: #{tpu_custom_call.1} parent=1 // pred_region
      %s117 = ssub.s32 64, 64
      %118 = vsyncadd [#allocation4], %s117
      %s120 = sshll.u32 [#allocation5], 4
      %s121 = int_to_ptr.vmem [resolvable:$true] %s120
      %123 = dma.vmem_to_hbm [thread:$0]  %s121, 64, %s3, [#allocation4]
    $region21: #{tpu_custom_call.1} parent=1 // pred_fallthru
      _
    // Predicated region
    $region22: #{tpu_custom_call.1} parent=1 // pred_check
      _
    $region23: #{tpu_custom_call.1} parent=1 // pred_check_branch
      %125 = sbr.rel (0) target = $region25
    $region24: #{tpu_custom_call.1} parent=1 // pred_region
      %126 = dma.done [#allocation4], 64
    $region25: #{tpu_custom_call.1} parent=1 // pred_fallthru
      _
    %127 = vsyncpa [#allocation3], 1
    %128 = vsyncpa [#allocation4], 1

</llo_original>
